<compile_context>
chip_gen: v7x
topology: tpu7x:2x2x1
jax: 0.10.0
libtpu: 0.0.40
codegen_flags: <defaults>
</compile_context>

<pallas_src>
import functools

import jax
import jax.numpy as jnp
from jax import lax
from jax.experimental import pallas as pl
from jax.experimental.pallas import tpu as pltpu

LANE = 128


def _round_up(x, m):
    return (x + m - 1) // m * m


def _pick_row_tile(ho):
    # Prefer 8 output rows per tile (keeps TR*Wo >= 128 for typical widths and
    # gives >=2 tiles for the parallel spatial axis), fall back to divisors.
    for tr in (8, 16, 32, 4, 2):
        if ho % tr == 0:
            return tr
    return ho


# ----------------------------------------------------------------------------
# Pallas kernel: fused depthwise-conv -> +bn1-bias -> relu -> 1x1 matmul -> +bn2-bias
# One grid step = one (image, output-row-tile) pair.
# ----------------------------------------------------------------------------
def _dwsep_kernel(x_ref, dww_ref, b1_ref, pww_ref, b2_ref, out_ref, *,
                  K, stride, TR, Wo):
    Cp = x_ref.shape[-1]
    r = pl.program_id(1)
    row0 = pl.multiple_of(r * (TR * stride), TR * stride)

    # --- depthwise KxK conv (BN1 scale already folded into the weights) -----
    # Seed the accumulator with the bn1 bias (hoisted broadcast, one per tile)
    # so no separate bias add is needed after the tap loop.
    dww = dww_ref[...]                                     # (K*K, Cp)
    acc = jnp.broadcast_to(b1_ref[0], (TR, Wo, Cp)).astype(jnp.float32)
    for dh in range(K):
        for dw in range(K):
            if stride == 1:
                patch = x_ref[0, pl.ds(row0 + dh, TR), pl.ds(dw, Wo), :]
            else:
                # TODO(synk): stride>1 path (strided pl.ds loads) is implemented
                # but not exercised by the demo below.
                patch = x_ref[0, pl.ds(row0 + dh, TR, stride),
                              pl.ds(dw, Wo, stride), :]
            acc = acc + patch * dww[dh * K + dw]

    # --- relu (dropout p=0 is the identity) ----------------------------------
    h = jnp.maximum(acc, 0.0)                              # (TR, Wo, Cp) f32

    # --- 1x1 pointwise conv == channel matmul on the MXU (bf16 in, f32 acc) --
    # Wo is a multiple of 8 at the demo shapes, so this reshape is tile-aligned.
    hf = h.reshape(TR * Wo, Cp).astype(pww_ref.dtype)
    y = jnp.dot(hf, pww_ref[...], preferred_element_type=jnp.float32)
    y = y + b2_ref[0]                                       # bn2 bias
    out_ref[0] = y.reshape(TR, Wo, -1).astype(out_ref.dtype)


# ----------------------------------------------------------------------------
# Wrapper: BN fusion into weights, lane padding, layout plumbing, pallas_call.
# ----------------------------------------------------------------------------
def dwsep_conv_forward(x_nchw, params, *, kernel_size, stride=1, eps=1e-5):
    assert kernel_size in (3, 5), "DWSepConv only supports kernel size 3 or 5"
    N, C, H, W = x_nchw.shape
    K = kernel_size
    pad = (K - 1) // 2
    Ho = (H + 2 * pad - K) // stride + 1
    Wo = (W + 2 * pad - K) // stride + 1
    Cout = C * stride
    Cp, Coutp = _round_up(C, LANE), _round_up(Cout, LANE)
    TR = _pick_row_tile(Ho)

    # Layout glue: NCHW -> NHWC, 'same' spatial pad, channel pad to lane width.
    # This is one fused XLA copy; the transpose is required for TPU layout anyway.
    # TODO(synk): for very large activations, move the halo handling into the
    # kernel (index_map halo + in-kernel zero fill) to drop this extra HBM pass.
    x = jnp.transpose(x_nchw, (0, 2, 3, 1)).astype(jnp.float32)
    xpad = jnp.pad(x, ((0, 0), (pad, pad), (pad, pad), (0, Cp - C)))
    Hp, Wp = H + 2 * pad, W + 2 * pad

    # Fold BatchNorm (eval mode) into the conv weights; only biases stay in-kernel.
    s1 = params["g1"] / jnp.sqrt(params["v1"] + eps)
    b1 = params["b1"] - params["m1"] * s1
    s2 = params["g2"] / jnp.sqrt(params["v2"] + eps)
    b2 = params["b2"] - params["m2"] * s2

    # Depthwise weight: torch (C,1,K,K) -> (K*K, Cp), scaled per-channel by s1.
    dww = jnp.transpose(params["dw_w"][:, 0], (1, 2, 0)).reshape(K * K, C) * s1[None, :]
    dww = jnp.pad(dww, ((0, 0), (0, Cp - C)))
    b1p = jnp.pad(b1, (0, Cp - C)).reshape(1, Cp)

    # Pointwise weight: torch (Cout,C,1,1) -> (Cp, Coutp), columns scaled by s2,
    # stored as bf16 for the MXU (accumulation stays f32 in the kernel).
    pww = jnp.transpose(params["pw_w"][:, :, 0, 0], (1, 0)) * s2[None, :]
    pww = jnp.pad(pww, ((0, Cp - C), (0, Coutp - Cout))).astype(jnp.bfloat16)
    b2p = jnp.pad(b2, (0, Coutp - Cout)).reshape(1, Coutp)

    kernel = functools.partial(_dwsep_kernel, K=K, stride=stride, TR=TR, Wo=Wo)

    out_nhwc = pl.pallas_call(
        kernel,
        out_shape=jax.ShapeDtypeStruct((N, Ho, Wo, Coutp), jnp.float32),
        grid_spec=pltpu.PrefetchScalarGridSpec(
            num_scalar_prefetch=0,
            grid=(N, Ho // TR),
            in_specs=[
                # Full padded image; index_map ignores the row-tile axis so the
                # block stays VMEM-resident across row tiles (one DMA per image).
                pl.BlockSpec((1, Hp, Wp, Cp), lambda n, r: (n, 0, 0, 0)),
                # Constant weight / bias blocks: fetched once, reused every step.
                pl.BlockSpec((K * K, Cp), lambda n, r: (0, 0)),
                pl.BlockSpec((1, Cp), lambda n, r: (0, 0)),
                pl.BlockSpec((Cp, Coutp), lambda n, r: (0, 0)),
                pl.BlockSpec((1, Coutp), lambda n, r: (0, 0)),
            ],
            out_specs=pl.BlockSpec((1, TR, Wo, Coutp), lambda n, r: (n, r, 0, 0)),
        ),
        compiler_params=pltpu.CompilerParams(
            dimension_semantics=("parallel", "parallel"),
            # Safe on all generations (<= scoped default on v6e/v7x, raises v5e's).
            vmem_limit_bytes=32 * 1024 * 1024,
        ),
    )(xpad, dww, b1p, pww, b2p)

    # Strip lane padding, back to PyTorch NCHW convention.
    return jnp.transpose(out_nhwc[..., :Cout], (0, 3, 1, 2))


# ----------------------------------------------------------------------------
# Pure-JAX reference (mirrors the PyTorch module, full f32) for correctness.
# ----------------------------------------------------------------------------
def dwsep_conv_reference(x_nchw, params, *, kernel_size, stride=1, eps=1e-5):
    C = x_nchw.shape[1]
    K = kernel_size
    pad = (K - 1) // 2
    x = jnp.transpose(x_nchw, (0, 2, 3, 1)).astype(jnp.float32)        # NHWC

    dw_hwio = jnp.transpose(params["dw_w"], (2, 3, 1, 0))               # (K,K,1,C)
    y = lax.conv_general_dilated(
        x, dw_hwio, window_strides=(stride, stride),
        padding=((pad, pad), (pad, pad)),
        dimension_numbers=("NHWC", "HWIO", "NHWC"),
        feature_group_count=C)
    y = (y - params["m1"]) / jnp.sqrt(params["v1"] + eps) * params["g1"] + params["b1"]
    y = jnp.maximum(y, 0.0)                                             # relu (dropout p=0)

    pw_hwio = jnp.transpose(params["pw_w"], (2, 3, 1, 0))               # (1,1,Cin,Cout)
    y = lax.conv_general_dilated(
        y, pw_hwio, window_strides=(1, 1), padding="VALID",
        dimension_numbers=("NHWC", "HWIO", "NHWC"))
    y = (y - params["m2"]) / jnp.sqrt(params["v2"] + eps) * params["g2"] + params["b2"]
    return jnp.transpose(y, (0, 3, 1, 2))                               # NCHW


def make_params(key, inplanes, kernel_size, stride):
    C, K = inplanes, kernel_size
    Cout = C * stride
    ks = jax.random.split(key, 10)
    return {
        "dw_w": jax.random.normal(ks[0], (C, 1, K, K), jnp.float32) * 0.2,
        "pw_w": jax.random.normal(ks[1], (Cout, C, 1, 1), jnp.float32) * 0.2,
        "g1": 1.0 + 0.1 * jax.random.normal(ks[2], (C,), jnp.float32),
        "b1": 0.1 * jax.random.normal(ks[3], (C,), jnp.float32),
        "m1": 0.1 * jax.random.normal(ks[4], (C,), jnp.float32),
        "v1": 1.0 + 0.1 * jax.random.uniform(ks[5], (C,), jnp.float32),
        "g2": 1.0 + 0.1 * jax.random.normal(ks[6], (Cout,), jnp.float32),
        "b2": 0.1 * jax.random.normal(ks[7], (Cout,), jnp.float32),
        "m2": 0.1 * jax.random.normal(ks[8], (Cout,), jnp.float32),
        "v2": 1.0 + 0.1 * jax.random.uniform(ks[9], (Cout,), jnp.float32),
    }


if __name__ == "__main__":
    key = jax.random.PRNGKey(0)
    kx, kp3, kp5 = jax.random.split(key, 3)

    N, C, H, W = 2, 4, 16, 16
    x = jax.random.normal(kx, (N, C, H, W), jnp.float32)

    ok = True
    for ksize, kparam in ((3, kp3), (5, kp5)):
        params = make_params(kparam, C, ksize, stride=1)
        out = dwsep_conv_forward(x, params, kernel_size=ksize, stride=1)
        out = jax.block_until_ready(out)
        ref = dwsep_conv_reference(x, params, kernel_size=ksize, stride=1)
        # Tolerance accounts for bf16 MXU operands (f32 accumulation) in the 1x1 conv.
        if not jnp.allclose(out, ref, rtol=2e-2, atol=2e-2):
            ok = False
            print(f"MISMATCH for kernel_size={ksize}: "
                  f"max abs err = {float(jnp.max(jnp.abs(out - ref)))}")

    if ok:
        print("KERNEL_OK")
</pallas_src>

<mosaic_0001>
module attributes {stable_mosaic.version = 11 : i64} {
  func.func @_dwsep_kernel(%arg0: i32, %arg1: i32, %arg2: memref<1x18x18x128xf32, #tpu.memory_space<vmem>>, %arg3: memref<9x128xf32, #tpu.memory_space<vmem>>, %arg4: memref<1x128xf32, #tpu.memory_space<vmem>>, %arg5: memref<128x128xbf16, #tpu.memory_space<vmem>>, %arg6: memref<1x128xf32, #tpu.memory_space<vmem>>, %arg7: memref<1x8x16x128xf32, #tpu.memory_space<vmem>>) attributes {dimension_semantics = [#tpu.dimension_semantics<parallel>, #tpu.dimension_semantics<parallel>], iteration_bounds = array<i64: 2, 2>, scalar_prefetch = 0 : i64, scratch_operands = 0 : i64, tpu.core_type = #tpu.core_type<tc>, window_params = [{transform_indices = @transform_0, window_bounds = array<i64: 1, 18, 18, 128>}, {pipeline_mode = #tpu.pipeline_mode<synchronous>, transform_indices = @transform_1, window_bounds = array<i64: 9, 128>}, {pipeline_mode = #tpu.pipeline_mode<synchronous>, transform_indices = @transform_2, window_bounds = array<i64: 1, 128>}, {pipeline_mode = #tpu.pipeline_mode<synchronous>, transform_indices = @transform_3, window_bounds = array<i64: 128, 128>}, {pipeline_mode = #tpu.pipeline_mode<synchronous>, transform_indices = @transform_4, window_bounds = array<i64: 1, 128>}, {transform_indices = @transform_5, window_bounds = array<i64: 1, 8, 16, 128>}]} {
    %c8_i32 = arith.constant 8 : i32
    %0 = arith.muli %arg1, %c8_i32 : i32
    %1 = tpu.assume_multiple %0, 8 : i32
    %c0 = arith.constant 0 : index
    %c0_0 = arith.constant 0 : index
    %2 = vector.load %arg3[%c0, %c0_0] : memref<9x128xf32, #tpu.memory_space<vmem>>, vector<9x128xf32>
    %c0_1 = arith.constant 0 : index
    %c0_2 = arith.constant 0 : index
    %3 = vector.load %arg4[%c0_1, %c0_2] : memref<1x128xf32, #tpu.memory_space<vmem>>, vector<1x128xf32>
    %4 = vector.shape_cast %3 : vector<1x128xf32> to vector<128xf32>
    %5 = vector.shape_cast %4 : vector<128xf32> to vector<1x1x128xf32>
    %6 = vector.broadcast %5 : vector<1x1x128xf32> to vector<8x16x128xf32>
    %c0_i32 = arith.constant 0 : i32
    %7 = arith.addi %1, %c0_i32 : i32
    %c0_3 = arith.constant 0 : index
    %8 = arith.index_cast %7 : i32 to index
    %c0_4 = arith.constant 0 : index
    %c0_5 = arith.constant 0 : index
    %9 = vector.load %arg2[%c0_3, %8, %c0_4, %c0_5] : memref<1x18x18x128xf32, #tpu.memory_space<vmem>>, vector<1x8x16x128xf32>
    %10 = vector.shape_cast %9 : vector<1x8x16x128xf32> to vector<8x16x128xf32>
    %11 = vector.extract_strided_slice %2 {offsets = [0, 0], sizes = [1, 128], strides = [1, 1]} : vector<9x128xf32> to vector<1x128xf32>
    %12 = vector.shape_cast %11 : vector<1x128xf32> to vector<128xf32>
    %13 = vector.shape_cast %12 : vector<128xf32> to vector<1x1x128xf32>
    %14 = vector.broadcast %13 : vector<1x1x128xf32> to vector<8x16x128xf32>
    %15 = arith.mulf %10, %14 : vector<8x16x128xf32>
    %16 = arith.addf %6, %15 : vector<8x16x128xf32>
    %c0_i32_6 = arith.constant 0 : i32
    %17 = arith.addi %1, %c0_i32_6 : i32
    %c0_7 = arith.constant 0 : index
    %18 = arith.index_cast %17 : i32 to index
    %c1 = arith.constant 1 : index
    %c0_8 = arith.constant 0 : index
    %19 = vector.load %arg2[%c0_7, %18, %c1, %c0_8] : memref<1x18x18x128xf32, #tpu.memory_space<vmem>>, vector<1x8x16x128xf32>
    %20 = vector.shape_cast %19 : vector<1x8x16x128xf32> to vector<8x16x128xf32>
    %21 = vector.extract_strided_slice %2 {offsets = [1, 0], sizes = [1, 128], strides = [1, 1]} : vector<9x128xf32> to vector<1x128xf32>
    %22 = vector.shape_cast %21 : vector<1x128xf32> to vector<128xf32>
    %23 = vector.shape_cast %22 : vector<128xf32> to vector<1x1x128xf32>
    %24 = vector.broadcast %23 : vector<1x1x128xf32> to vector<8x16x128xf32>
    %25 = arith.mulf %20, %24 : vector<8x16x128xf32>
    %26 = arith.addf %16, %25 : vector<8x16x128xf32>
    %c0_i32_9 = arith.constant 0 : i32
    %27 = arith.addi %1, %c0_i32_9 : i32
    %c0_10 = arith.constant 0 : index
    %28 = arith.index_cast %27 : i32 to index
    %c2 = arith.constant 2 : index
    %c0_11 = arith.constant 0 : index
    %29 = vector.load %arg2[%c0_10, %28, %c2, %c0_11] : memref<1x18x18x128xf32, #tpu.memory_space<vmem>>, vector<1x8x16x128xf32>
    %30 = vector.shape_cast %29 : vector<1x8x16x128xf32> to vector<8x16x128xf32>
    %31 = vector.extract_strided_slice %2 {offsets = [2, 0], sizes = [1, 128], strides = [1, 1]} : vector<9x128xf32> to vector<1x128xf32>
    %32 = vector.shape_cast %31 : vector<1x128xf32> to vector<128xf32>
    %33 = vector.shape_cast %32 : vector<128xf32> to vector<1x1x128xf32>
    %34 = vector.broadcast %33 : vector<1x1x128xf32> to vector<8x16x128xf32>
    %35 = arith.mulf %30, %34 : vector<8x16x128xf32>
    %36 = arith.addf %26, %35 : vector<8x16x128xf32>
    %c1_i32 = arith.constant 1 : i32
    %37 = arith.addi %1, %c1_i32 : i32
    %c0_12 = arith.constant 0 : index
    %38 = arith.index_cast %37 : i32 to index
    %c0_13 = arith.constant 0 : index
    %c0_14 = arith.constant 0 : index
    %39 = vector.load %arg2[%c0_12, %38, %c0_13, %c0_14] : memref<1x18x18x128xf32, #tpu.memory_space<vmem>>, vector<1x8x16x128xf32>
    %40 = vector.shape_cast %39 : vector<1x8x16x128xf32> to vector<8x16x128xf32>
    %41 = vector.extract_strided_slice %2 {offsets = [3, 0], sizes = [1, 128], strides = [1, 1]} : vector<9x128xf32> to vector<1x128xf32>
    %42 = vector.shape_cast %41 : vector<1x128xf32> to vector<128xf32>
    %43 = vector.shape_cast %42 : vector<128xf32> to vector<1x1x128xf32>
    %44 = vector.broadcast %43 : vector<1x1x128xf32> to vector<8x16x128xf32>
    %45 = arith.mulf %40, %44 : vector<8x16x128xf32>
    %46 = arith.addf %36, %45 : vector<8x16x128xf32>
    %c1_i32_15 = arith.constant 1 : i32
    %47 = arith.addi %1, %c1_i32_15 : i32
    %c0_16 = arith.constant 0 : index
    %48 = arith.index_cast %47 : i32 to index
    %c1_17 = arith.constant 1 : index
    %c0_18 = arith.constant 0 : index
    %49 = vector.load %arg2[%c0_16, %48, %c1_17, %c0_18] : memref<1x18x18x128xf32, #tpu.memory_space<vmem>>, vector<1x8x16x128xf32>
    %50 = vector.shape_cast %49 : vector<1x8x16x128xf32> to vector<8x16x128xf32>
    %51 = vector.extract_strided_slice %2 {offsets = [4, 0], sizes = [1, 128], strides = [1, 1]} : vector<9x128xf32> to vector<1x128xf32>
    %52 = vector.shape_cast %51 : vector<1x128xf32> to vector<128xf32>
    %53 = vector.shape_cast %52 : vector<128xf32> to vector<1x1x128xf32>
    %54 = vector.broadcast %53 : vector<1x1x128xf32> to vector<8x16x128xf32>
    %55 = arith.mulf %50, %54 : vector<8x16x128xf32>
    %56 = arith.addf %46, %55 : vector<8x16x128xf32>
    %c1_i32_19 = arith.constant 1 : i32
    %57 = arith.addi %1, %c1_i32_19 : i32
    %c0_20 = arith.constant 0 : index
    %58 = arith.index_cast %57 : i32 to index
    %c2_21 = arith.constant 2 : index
    %c0_22 = arith.constant 0 : index
    %59 = vector.load %arg2[%c0_20, %58, %c2_21, %c0_22] : memref<1x18x18x128xf32, #tpu.memory_space<vmem>>, vector<1x8x16x128xf32>
    %60 = vector.shape_cast %59 : vector<1x8x16x128xf32> to vector<8x16x128xf32>
    %61 = vector.extract_strided_slice %2 {offsets = [5, 0], sizes = [1, 128], strides = [1, 1]} : vector<9x128xf32> to vector<1x128xf32>
    %62 = vector.shape_cast %61 : vector<1x128xf32> to vector<128xf32>
    %63 = vector.shape_cast %62 : vector<128xf32> to vector<1x1x128xf32>
    %64 = vector.broadcast %63 : vector<1x1x128xf32> to vector<8x16x128xf32>
    %65 = arith.mulf %60, %64 : vector<8x16x128xf32>
    %66 = arith.addf %56, %65 : vector<8x16x128xf32>
    %c2_i32 = arith.constant 2 : i32
    %67 = arith.addi %1, %c2_i32 : i32
    %c0_23 = arith.constant 0 : index
    %68 = arith.index_cast %67 : i32 to index
    %c0_24 = arith.constant 0 : index
    %c0_25 = arith.constant 0 : index
    %69 = vector.load %arg2[%c0_23, %68, %c0_24, %c0_25] : memref<1x18x18x128xf32, #tpu.memory_space<vmem>>, vector<1x8x16x128xf32>
    %70 = vector.shape_cast %69 : vector<1x8x16x128xf32> to vector<8x16x128xf32>
    %71 = vector.extract_strided_slice %2 {offsets = [6, 0], sizes = [1, 128], strides = [1, 1]} : vector<9x128xf32> to vector<1x128xf32>
    %72 = vector.shape_cast %71 : vector<1x128xf32> to vector<128xf32>
    %73 = vector.shape_cast %72 : vector<128xf32> to vector<1x1x128xf32>
    %74 = vector.broadcast %73 : vector<1x1x128xf32> to vector<8x16x128xf32>
    %75 = arith.mulf %70, %74 : vector<8x16x128xf32>
    %76 = arith.addf %66, %75 : vector<8x16x128xf32>
    %c2_i32_26 = arith.constant 2 : i32
    %77 = arith.addi %1, %c2_i32_26 : i32
    %c0_27 = arith.constant 0 : index
    %78 = arith.index_cast %77 : i32 to index
    %c1_28 = arith.constant 1 : index
    %c0_29 = arith.constant 0 : index
    %79 = vector.load %arg2[%c0_27, %78, %c1_28, %c0_29] : memref<1x18x18x128xf32, #tpu.memory_space<vmem>>, vector<1x8x16x128xf32>
    %80 = vector.shape_cast %79 : vector<1x8x16x128xf32> to vector<8x16x128xf32>
    %81 = vector.extract_strided_slice %2 {offsets = [7, 0], sizes = [1, 128], strides = [1, 1]} : vector<9x128xf32> to vector<1x128xf32>
    %82 = vector.shape_cast %81 : vector<1x128xf32> to vector<128xf32>
    %83 = vector.shape_cast %82 : vector<128xf32> to vector<1x1x128xf32>
    %84 = vector.broadcast %83 : vector<1x1x128xf32> to vector<8x16x128xf32>
    %85 = arith.mulf %80, %84 : vector<8x16x128xf32>
    %86 = arith.addf %76, %85 : vector<8x16x128xf32>
    %c2_i32_30 = arith.constant 2 : i32
    %87 = arith.addi %1, %c2_i32_30 : i32
    %c0_31 = arith.constant 0 : index
    %88 = arith.index_cast %87 : i32 to index
    %c2_32 = arith.constant 2 : index
    %c0_33 = arith.constant 0 : index
    %89 = vector.load %arg2[%c0_31, %88, %c2_32, %c0_33] : memref<1x18x18x128xf32, #tpu.memory_space<vmem>>, vector<1x8x16x128xf32>
    %90 = vector.shape_cast %89 : vector<1x8x16x128xf32> to vector<8x16x128xf32>
    %91 = vector.extract_strided_slice %2 {offsets = [8, 0], sizes = [1, 128], strides = [1, 1]} : vector<9x128xf32> to vector<1x128xf32>
    %92 = vector.shape_cast %91 : vector<1x128xf32> to vector<128xf32>
    %93 = vector.shape_cast %92 : vector<128xf32> to vector<1x1x128xf32>
    %94 = vector.broadcast %93 : vector<1x1x128xf32> to vector<8x16x128xf32>
    %95 = arith.mulf %90, %94 : vector<8x16x128xf32>
    %96 = arith.addf %86, %95 : vector<8x16x128xf32>
    %cst = arith.constant 0.000000e+00 : f32
    %97 = vector.broadcast %cst : f32 to vector<8x16x128xf32>
    %98 = arith.maximumf %96, %97 : vector<8x16x128xf32>
    %99 = vector.shape_cast %98 : vector<8x16x128xf32> to vector<128x128xf32>
    %100 = arith.truncf %99 : vector<128x128xf32> to vector<128x128xbf16>
    %c0_34 = arith.constant 0 : index
    %c0_35 = arith.constant 0 : index
    %101 = vector.load %arg5[%c0_34, %c0_35] : memref<128x128xbf16, #tpu.memory_space<vmem>>, vector<128x128xbf16>
    %cst_36 = arith.constant dense<0.000000e+00> : vector<128x128xf32>
    %102 = tpu.matmul %100, %101, %cst_36 {dimension_numbers = #tpu.dot_dimension_numbers<[1], [0], [0], [1], [0, 0, 1, 1], [], []>} : vector<128x128xbf16>, vector<128x128xbf16>, vector<128x128xf32> -> vector<128x128xf32>
    %c0_37 = arith.constant 0 : index
    %c0_38 = arith.constant 0 : index
    %103 = vector.load %arg6[%c0_37, %c0_38] : memref<1x128xf32, #tpu.memory_space<vmem>>, vector<1x128xf32>
    %104 = vector.shape_cast %103 : vector<1x128xf32> to vector<128xf32>
    %105 = vector.shape_cast %104 : vector<128xf32> to vector<1x128xf32>
    %106 = vector.broadcast %105 : vector<1x128xf32> to vector<128x128xf32>
    %107 = arith.addf %102, %106 : vector<128x128xf32>
    %108 = vector.shape_cast %107 : vector<128x128xf32> to vector<8x16x128xf32>
    %c0_39 = arith.constant 0 : index
    %c0_40 = arith.constant 0 : index
    %c0_41 = arith.constant 0 : index
    %c0_42 = arith.constant 0 : index
    %109 = vector.load %arg7[%c0_39, %c0_40, %c0_41, %c0_42] : memref<1x8x16x128xf32, #tpu.memory_space<vmem>>, vector<1x8x16x128xf32>
    %110 = vector.shape_cast %109 : vector<1x8x16x128xf32> to vector<8x16x128xf32>
    %111 = vector.shape_cast %108 : vector<8x16x128xf32> to vector<1x8x16x128xf32>
    tpu.vector_store %arg7[%c0_39, %c0_40, %c0_41, %c0_42], %111 {strides = array<i32>} : memref<1x8x16x128xf32, #tpu.memory_space<vmem>>, vector<1x8x16x128xf32>,
    return
  }
  func.func @transform_0(%arg0: i32, %arg1: i32) -> (i32, i32, i32, i32) {
    %c0_i32 = arith.constant 0 : i32
    %c0_i32_0 = arith.constant 0 : i32
    %c0_i32_1 = arith.constant 0 : i32
    %c0_i32_2 = arith.constant 0 : i32
    return %arg0, %c0_i32, %c0_i32_0, %c0_i32_1 : i32, i32, i32, i32
  }
  func.func @transform_1(%arg0: i32, %arg1: i32) -> (i32, i32) {
    %c0_i32 = arith.constant 0 : i32
    %c0_i32_0 = arith.constant 0 : i32
    %c0_i32_1 = arith.constant 0 : i32
    return %c0_i32, %c0_i32_0 : i32, i32
  }
  func.func @transform_2(%arg0: i32, %arg1: i32) -> (i32, i32) {
    %c0_i32 = arith.constant 0 : i32
    %c0_i32_0 = arith.constant 0 : i32
    %c0_i32_1 = arith.constant 0 : i32
    return %c0_i32, %c0_i32_0 : i32, i32
  }
  func.func @transform_3(%arg0: i32, %arg1: i32) -> (i32, i32) {
    %c0_i32 = arith.constant 0 : i32
    %c0_i32_0 = arith.constant 0 : i32
    %c0_i32_1 = arith.constant 0 : i32
    return %c0_i32, %c0_i32_0 : i32, i32
  }
  func.func @transform_4(%arg0: i32, %arg1: i32) -> (i32, i32) {
    %c0_i32 = arith.constant 0 : i32
    %c0_i32_0 = arith.constant 0 : i32
    %c0_i32_1 = arith.constant 0 : i32
    return %c0_i32, %c0_i32_0 : i32, i32
  }
  func.func @transform_5(%arg0: i32, %arg1: i32) -> (i32, i32, i32, i32) {
    %c0_i32 = arith.constant 0 : i32
    %c0_i32_0 = arith.constant 0 : i32
    %c0_i32_1 = arith.constant 0 : i32
    return %arg0, %arg1, %c0_i32, %c0_i32_0 : i32, i32, i32, i32
  }
}

</mosaic_0001>

<llo_original>
// kernel: tpu_custom_call.1
$region0: #{tpu_custom_call.1}
  #allocation0 [shape = 'u32[]', space=smem, size = 0x4, offset = 0x4, fixed_abs, tag = 'smem constant byte address 0x4 - core index']
  #allocation1 [shape = 'u32[144,128]{1,0:T(1,128)}', space=vmem, size = 0x12000, scoped, tag = 'internal scratch']
  %s0 = inlined_call_operand.vmem [shape: f32[2,18,18,128], index: 0, kind: input, shape index: {}]
  %s1 = inlined_call_operand.vmem [shape: f32[9,128], index: 1, kind: input, shape index: {}]
  %s2 = inlined_call_operand.vmem [shape: f32[1,128], index: 2, kind: input, shape index: {}]
  %s3 = inlined_call_operand.vmem [shape: bf16[128,128], index: 3, kind: input, shape index: {}]
  %s4 = inlined_call_operand.vmem [shape: f32[1,128], index: 4, kind: input, shape index: {}]
  %s5 = inlined_call_operand.hbm [shape: f32[2,16,16,128], index: 5, kind: output, shape index: {}]
  %s6 = sld [smem:[#allocation0]]
  $region53: #{tpu_custom_call.1} parent=0
    _
  %s8 = ssub.s32 1, %s6
  %s9 = scalar_select 0, %s8, %s6
  $region1: #{tpu_custom_call.1} parent=0
    #allocation2 [shape = 'u8[131072]{0}', space=vmem, size = 0x20000, scoped, tag = 'output window, operand 0']
    #allocation3 [shape = 's32[2]{0}', space=sflag, size = 0x8, scoped, tag = 'scoped memory for tpu_custom_call.1']
    %10 = vsyncpa [#allocation3], 0
    %s11 = scalar_lea.sflag [#allocation3], 1
    %12 = vsyncpa %s11, 0
    loop: start=0, step=1, limit=6
    $region2: #{tpu_custom_call.1} parent=1 // loop_pre_header
      _
    $region3: #{tpu_custom_call.1} parent=1 // loop_header
      %s14 = sphi 0, %s18
      %p15 = scmp.ge.s32.totalorder %s14, 6
      %s21 = sphi 0, %s33
      %s22 = sphi 0, %s29
      %s23 = sphi 0, %s21
      %s24 = sphi 0, %s22
      %s25 = sphi 0, %s23
      %s26 = sphi 0, %s24
      %s36 = sphi 0, %s38
      %s39 = sphi 0, %s36
      %s40 = sphi 0, %s39
      %s56 = sphi 0, %s40
      %s60 = sphi 0, %s60
      %s62 = sphi 0, %s60
      %s63 = sphi 0, %s62
      %s77 = sphi 0, %s63
      %s81 = sphi 0, %s81
      %s83 = sphi 0, %s81
      %s84 = sphi 0, %s83
      %s98 = sphi 0, %s84
      %s102 = sphi 0, %s102
      %s104 = sphi 0, %s102
      %s105 = sphi 0, %s104
      %s119 = sphi 0, %s105
      %s123 = sphi 0, %s123
      %s125 = sphi 0, %s123
      %s126 = sphi 0, %s125
      %s140 = sphi 0, %s126
      %s148 = sphi 0, %s150
      %s151 = sphi 0, %s148
      %s152 = sphi 0, %s151
      %s168 = sphi 0, %s152
    $region4: #{tpu_custom_call.1} parent=1 // loop_header_branch
      %17 = sbr.rel (%p15) target = $region8
    $region5: #{tpu_custom_call.1} parent=1 // loop_body
      %s19 = ssub.s32 %s14, 1
      %s20 = ssub.s32 %s14, 2
      %s27 = sadd.s32 1, %s22
      %p28 = scmp.ge.s32.totalorder %s27, 2
      %s29 = scalar_select %p28, 0, %s27
      %s30 = sadd.s32 1, %s21
      %s31 = scalar_select %p28, %s30, %s21
      %p32 = scmp.ge.s32.totalorder %s31, 2
      %s33 = scalar_select %p32, 0, %s31
      %s34 = ssub.s32 %s21, %s33
      %p35 = scmp.eq.s32.totalorder %s34, 0
      %s37 = sadd.s32 %s36, 1
      %s38 = scalar_select %p35, %s36, %s37
      %p41 = pneg %p35
      %p42 = scmp.eq.s32.totalorder %s14, 3
      %p43 = por %p41, %p42
      %p44 = scmp.ne.s32.totalorder %s36, %s39
      %p45 = scmp.eq.s32.totalorder %s14, 0
      %p46 = por %p44, %p45
      %p47 = scmp.ne.s32.totalorder %s36, %s39
      %p48 = scmp.eq.s32.totalorder %s19, 3
      %p49 = por %p47, %p48
      %p50 = scmp.ne.s32.totalorder %s39, %s40
      %p51 = scmp.eq.s32.totalorder %s19, 0
      %p52 = por %p50, %p51
      %p53 = scmp.ne.s32.totalorder %s39, %s40
      %p54 = scmp.eq.s32.totalorder %s20, 3
      %p55 = por %p53, %p54
      %p57 = scmp.ne.s32.totalorder %s40, %s56
      %p58 = scmp.eq.s32.totalorder %s20, 0
      %p59 = por %p57, %p58
      %s61 = sadd.s32 %s60, 1
      %p64 = scmp.eq.s32.totalorder %s14, 3
      %p65 = scmp.ne.s32.totalorder %s60, %s62
      %p66 = scmp.eq.s32.totalorder %s14, 0
      %p67 = por %p65, %p66
      %p68 = scmp.ne.s32.totalorder %s60, %s62
      %p69 = scmp.eq.s32.totalorder %s19, 3
      %p70 = por %p68, %p69
      %p71 = scmp.ne.s32.totalorder %s62, %s63
      %p72 = scmp.eq.s32.totalorder %s19, 0
      %p73 = por %p71, %p72
      %p74 = scmp.ne.s32.totalorder %s62, %s63
      %p75 = scmp.eq.s32.totalorder %s20, 3
      %p76 = por %p74, %p75
      %p78 = scmp.ne.s32.totalorder %s63, %s77
      %p79 = scmp.eq.s32.totalorder %s20, 0
      %p80 = por %p78, %p79
      %s82 = sadd.s32 %s81, 1
      %p85 = scmp.eq.s32.totalorder %s14, 3
      %p86 = scmp.ne.s32.totalorder %s81, %s83
      %p87 = scmp.eq.s32.totalorder %s14, 0
      %p88 = por %p86, %p87
      %p89 = scmp.ne.s32.totalorder %s81, %s83
      %p90 = scmp.eq.s32.totalorder %s19, 3
      %p91 = por %p89, %p90
      %p92 = scmp.ne.s32.totalorder %s83, %s84
      %p93 = scmp.eq.s32.totalorder %s19, 0
      %p94 = por %p92, %p93
      %p95 = scmp.ne.s32.totalorder %s83, %s84
      %p96 = scmp.eq.s32.totalorder %s20, 3
      %p97 = por %p95, %p96
      %p99 = scmp.ne.s32.totalorder %s84, %s98
      %p100 = scmp.eq.s32.totalorder %s20, 0
      %p101 = por %p99, %p100
      %s103 = sadd.s32 %s102, 1
      %p106 = scmp.eq.s32.totalorder %s14, 3
      %p107 = scmp.ne.s32.totalorder %s102, %s104
      %p108 = scmp.eq.s32.totalorder %s14, 0
      %p109 = por %p107, %p108
      %p110 = scmp.ne.s32.totalorder %s102, %s104
      %p111 = scmp.eq.s32.totalorder %s19, 3
      %p112 = por %p110, %p111
      %p113 = scmp.ne.s32.totalorder %s104, %s105
      %p114 = scmp.eq.s32.totalorder %s19, 0
      %p115 = por %p113, %p114
      %p116 = scmp.ne.s32.totalorder %s104, %s105
      %p117 = scmp.eq.s32.totalorder %s20, 3
      %p118 = por %p116, %p117
      %p120 = scmp.ne.s32.totalorder %s105, %s119
      %p121 = scmp.eq.s32.totalorder %s20, 0
      %p122 = por %p120, %p121
      %s124 = sadd.s32 %s123, 1
      %p127 = scmp.eq.s32.totalorder %s14, 3
      %p128 = scmp.ne.s32.totalorder %s123, %s125
      %p129 = scmp.eq.s32.totalorder %s14, 0
      %p130 = por %p128, %p129
      %p131 = scmp.ne.s32.totalorder %s123, %s125
      %p132 = scmp.eq.s32.totalorder %s19, 3
      %p133 = por %p131, %p132
      %p134 = scmp.ne.s32.totalorder %s125, %s126
      %p135 = scmp.eq.s32.totalorder %s19, 0
      %p136 = por %p134, %p135
      %p137 = scmp.ne.s32.totalorder %s125, %s126
      %p138 = scmp.eq.s32.totalorder %s20, 3
      %p139 = por %p137, %p138
      %p141 = scmp.ne.s32.totalorder %s126, %s140
      %p142 = scmp.eq.s32.totalorder %s20, 0
      %p143 = por %p141, %p142
      %s144 = ssub.s32 %s21, %s33
      %s145 = ssub.s32 %s22, %s29
      %s146 = sor.u32 %s144, %s145
      %p147 = scmp.eq.s32.totalorder %s146, 0
      %s149 = sadd.s32 %s148, 1
      %s150 = scalar_select %p147, %s148, %s149
      %p153 = pneg %p147
      %p154 = scmp.eq.s32.totalorder %s14, 3
      %p155 = por %p153, %p154
      %p156 = scmp.ne.s32.totalorder %s148, %s151
      %p157 = scmp.eq.s32.totalorder %s14, 0
      %p158 = por %p156, %p157
      %p159 = scmp.ne.s32.totalorder %s148, %s151
      %p160 = scmp.eq.s32.totalorder %s19, 3
      %p161 = por %p159, %p160
      %p162 = scmp.ne.s32.totalorder %s151, %s152
      %p163 = scmp.eq.s32.totalorder %s19, 0
      %p164 = por %p162, %p163
      %p165 = scmp.ne.s32.totalorder %s151, %s152
      %p166 = scmp.eq.s32.totalorder %s20, 3
      %p167 = por %p165, %p166
      %p169 = scmp.ne.s32.totalorder %s152, %s168
      %p170 = scmp.eq.s32.totalorder %s20, 0
      %p171 = por %p169, %p170
      %p172 = scmp.le.s32.totalorder 1, %s14
      %p173 = scmp.lt.s32.totalorder %s14, 5
      %p174 = pnand %p172, %p173
      %p175 = pneg %p174
      // Predicated region
      $region9: #{tpu_custom_call.1} parent=5 // pred_check
        _
      $region10: #{tpu_custom_call.1} parent=5 // pred_check_branch
        %177 = sbr.rel (%p174) target = $region12
      $region11: #{tpu_custom_call.1} parent=5 // pred_region
        %s178 = ssub.s32 %s14, 1
        // Predicated region
        $region13: #{tpu_custom_call.1} parent=11 // pred_check
          %p179 = pneg %p73
        $region14: #{tpu_custom_call.1} parent=11 // pred_check_branch
          %181 = sbr.rel (%p179) target = $region16
        $region15: #{tpu_custom_call.1} parent=11 // pred_region
          _
        $region16: #{tpu_custom_call.1} parent=11 // pred_fallthru
          _
        // Predicated region
        $region17: #{tpu_custom_call.1} parent=11 // pred_check
          %p182 = pneg %p94
        $region18: #{tpu_custom_call.1} parent=11 // pred_check_branch
          %184 = sbr.rel (%p182) target = $region20
        $region19: #{tpu_custom_call.1} parent=11 // pred_region
          _
        $region20: #{tpu_custom_call.1} parent=11 // pred_fallthru
          _
        // Predicated region
        $region21: #{tpu_custom_call.1} parent=11 // pred_check
          %p185 = pneg %p115
        $region22: #{tpu_custom_call.1} parent=11 // pred_check_branch
          %187 = sbr.rel (%p185) target = $region24
        $region23: #{tpu_custom_call.1} parent=11 // pred_region
          _
        $region24: #{tpu_custom_call.1} parent=11 // pred_fallthru
          _
        // Predicated region
        $region25: #{tpu_custom_call.1} parent=11 // pred_check
          %p188 = pneg %p136
        $region26: #{tpu_custom_call.1} parent=11 // pred_check_branch
          %190 = sbr.rel (%p188) target = $region28
        $region27: #{tpu_custom_call.1} parent=11 // pred_region
          _
        $region28: #{tpu_custom_call.1} parent=11 // pred_fallthru
          _
      $region12: #{tpu_custom_call.1} parent=5 // pred_fallthru
        _
      %p191 = scmp.lt.s32.totalorder %s14, 4
      // Predicated region
      $region29: #{tpu_custom_call.1} parent=5 // pred_check
        %p192 = pneg %p191
      $region30: #{tpu_custom_call.1} parent=5 // pred_check_branch
        %194 = sbr.rel (%p192) target = $region32
      $region31: #{tpu_custom_call.1} parent=5 // pred_region
        // Predicated region
        $region33: #{tpu_custom_call.1} parent=31 // pred_check
          %p195 = pneg %p46
        $region34: #{tpu_custom_call.1} parent=31 // pred_check_branch
          %197 = sbr.rel (%p195) target = $region36
        $region35: #{tpu_custom_call.1} parent=31 // pred_region
          %p198 = scmp.lt.s32.totalorder %s21, 1
          %s199 = scalar_select %p198, %s21, 1
          %s200 = smul.addr %s199, 54
          %s201 = smul.addr %s200, 8
          %s202 = scalar_lea.vmem %s0, %s201
        $region36: #{tpu_custom_call.1} parent=31 // pred_fallthru
          _
      $region32: #{tpu_custom_call.1} parent=5 // pred_fallthru
        _
      %p203 = scmp.le.s32.totalorder 1, %s14
      %p204 = scmp.lt.s32.totalorder %s14, 5
      %p205 = pnand %p203, %p204
      %p206 = pneg %p205
      // Predicated region
      $region37: #{tpu_custom_call.1} parent=5 // pred_check
        _
      $region38: #{tpu_custom_call.1} parent=5 // pred_check_branch
        %208 = sbr.rel (%p205) target = $region40
      $region39: #{tpu_custom_call.1} parent=5 // pred_region
        %s209 = ssub.s32 %s14, 1
        %p210 = scmp.lt.s32.totalorder %s23, 1
        %s211 = scalar_select %p210, %s23, 1
        %s212 = smul.addr %s211, 54
        %s213 = smul.addr %s212, 8
        %s214 = scalar_lea.vmem %s0, %s213
        %p215 = pneg %p52
        %p216 = pneg %p49
        %p217 = pneg %p73
        %p218 = pneg %p70
        %p219 = pneg %p94
        %p220 = pneg %p91
        %p221 = pneg %p115
        %p222 = pneg %p112
        %p223 = pneg %p136
        %p224 = pneg %p133
        %p225 = pneg %p164
        %p226 = pneg %p161
        %s227 = sand.u32 %s151, 1
        %s228 = scalar_lea.sflag [#allocation3], %s227
        %s229 = sand.u32 %s151, 1
        %s230 = smul.addr %s229, 128
        %s231 = scalar_lea.vmem [#allocation2], %s230
        %p232 = scmp.lt.s32.totalorder %s23, 1
        %s233 = scalar_select %p232, %s23, 1
        %s234 = smul.addr %s233, 54
        %s235 = smul.addr %s234, 8
        %s236 = scalar_lea.vmem %s0, %s235
        %s237 = smul.u32 8, %s24
        %s239 = smul.u32 %s24, 8
        %v240 = vld [vmem:[%s1] sm:$0xff]
        %v241 = vld [vmem:[%s1 + $0x8] sm:$0x1]
        %v242 = vld [vmem:[%s2] sm:$0x1]
        %v244 = vlaneseq
        %v245 = vshrl.u32 %v244, 7
        %v246 = vsub.s32 0, %v245
        %v247 = vrot.slane %v242, %v246
        %s249 = smul.u32 %s239, 24
        %s250 = scalar_lea.vmem %s236, %s249
        %v251 = vld [vmem:[%s250] sm:$0xff]
        %v252 = vld [vmem:[%s250 + $0x8] sm:$0xff]
        %v253 = vld [vmem:[%s250 + $0x18] sm:$0xff]
        %v254 = vld [vmem:[%s250 + $0x20] sm:$0xff]
        %v255 = vld [vmem:[%s250 + $0x30] sm:$0xff]
        %v256 = vld [vmem:[%s250 + $0x38] sm:$0xff]
        %v257 = vld [vmem:[%s250 + $0x48] sm:$0xff]
        %v258 = vld [vmem:[%s250 + $0x50] sm:$0xff]
        %v259 = vld [vmem:[%s250 + $0x60] sm:$0xff]
        %v260 = vld [vmem:[%s250 + $0x68] sm:$0xff]
        %v261 = vld [vmem:[%s250 + $0x78] sm:$0xff]
        %v262 = vld [vmem:[%s250 + $0x80] sm:$0xff]
        %v263 = vld [vmem:[%s250 + $0x90] sm:$0xff]
        %v264 = vld [vmem:[%s250 + $0x98] sm:$0xff]
        %v265 = vld [vmem:[%s250 + $0xa8] sm:$0xff]
        %v266 = vld [vmem:[%s250 + $0xb0] sm:$0xff]
        %v267 = vlaneseq
        %v268 = vshrl.u32 %v267, 7
        %v269 = vsub.s32 0, %v268
        %v270 = vrot.slane %v240, %v269
        %v271 = vmul.f32 %v251, %v270
        %v272 = vmul.f32 %v252, %v270
        %v273 = vmul.f32 %v253, %v270
        %v274 = vmul.f32 %v254, %v270
        %v275 = vmul.f32 %v255, %v270
        %v276 = vmul.f32 %v256, %v270
        %v277 = vmul.f32 %v257, %v270
        %v278 = vmul.f32 %v258, %v270
        %v279 = vmul.f32 %v259, %v270
        %v280 = vmul.f32 %v260, %v270
        %v281 = vmul.f32 %v261, %v270
        %v282 = vmul.f32 %v262, %v270
        %v283 = vmul.f32 %v263, %v270
        %v284 = vmul.f32 %v264, %v270
        %v285 = vmul.f32 %v265, %v270
        %v286 = vmul.f32 %v266, %v270
        %v287 = vadd.f32 %v247, %v271
        %v288 = vadd.f32 %v247, %v272
        %v289 = vadd.f32 %v247, %v273
        %v290 = vadd.f32 %v247, %v274
        %v291 = vadd.f32 %v247, %v275
        %v292 = vadd.f32 %v247, %v276
        %v293 = vadd.f32 %v247, %v277
        %v294 = vadd.f32 %v247, %v278
        %v295 = vadd.f32 %v247, %v279
        %v296 = vadd.f32 %v247, %v280
        %v297 = vadd.f32 %v247, %v281
        %v298 = vadd.f32 %v247, %v282
        %v299 = vadd.f32 %v247, %v283
        %v300 = vadd.f32 %v247, %v284
        %v301 = vadd.f32 %v247, %v285
        %v302 = vadd.f32 %v247, %v286
        %v303 = vld [vmem:[%s250 + $0x1] sm:$0xff]
        %v304 = vld [vmem:[%s250 + $0x9] sm:$0xff]
        %v305 = vld [vmem:[%s250 + $0x19] sm:$0xff]
        %v306 = vld [vmem:[%s250 + $0x21] sm:$0xff]
        %v307 = vld [vmem:[%s250 + $0x31] sm:$0xff]
        %v308 = vld [vmem:[%s250 + $0x39] sm:$0xff]
        %v309 = vld [vmem:[%s250 + $0x49] sm:$0xff]
        %v310 = vld [vmem:[%s250 + $0x51] sm:$0xff]
        %v311 = vld [vmem:[%s250 + $0x61] sm:$0xff]
        %v312 = vld [vmem:[%s250 + $0x69] sm:$0xff]
        %v313 = vld [vmem:[%s250 + $0x79] sm:$0xff]
        %v314 = vld [vmem:[%s250 + $0x81] sm:$0xff]
        %v315 = vld [vmem:[%s250 + $0x91] sm:$0xff]
        %v316 = vld [vmem:[%s250 + $0x99] sm:$0xff]
        %v317 = vld [vmem:[%s250 + $0xa9] sm:$0xff]
        %v318 = vld [vmem:[%s250 + $0xb1] sm:$0xff]
        %v319 = vlaneseq
        %v320 = vshrl.u32 %v319, 7
        %v321 = vsub.s32 1, %v320
        %v322 = vrot.slane %v240, %v321
        %v323 = vmul.f32 %v303, %v322
        %v324 = vmul.f32 %v304, %v322
        %v325 = vmul.f32 %v305, %v322
        %v326 = vmul.f32 %v306, %v322
        %v327 = vmul.f32 %v307, %v322
        %v328 = vmul.f32 %v308, %v322
        %v329 = vmul.f32 %v309, %v322
        %v330 = vmul.f32 %v310, %v322
        %v331 = vmul.f32 %v311, %v322
        %v332 = vmul.f32 %v312, %v322
        %v333 = vmul.f32 %v313, %v322
        %v334 = vmul.f32 %v314, %v322
        %v335 = vmul.f32 %v315, %v322
        %v336 = vmul.f32 %v316, %v322
        %v337 = vmul.f32 %v317, %v322
        %v338 = vmul.f32 %v318, %v322
        %v339 = vadd.f32 %v287, %v323
        %v340 = vadd.f32 %v288, %v324
        %v341 = vadd.f32 %v289, %v325
        %v342 = vadd.f32 %v290, %v326
        %v343 = vadd.f32 %v291, %v327
        %v344 = vadd.f32 %v292, %v328
        %v345 = vadd.f32 %v293, %v329
        %v346 = vadd.f32 %v294, %v330
        %v347 = vadd.f32 %v295, %v331
        %v348 = vadd.f32 %v296, %v332
        %v349 = vadd.f32 %v297, %v333
        %v350 = vadd.f32 %v298, %v334
        %v351 = vadd.f32 %v299, %v335
        %v352 = vadd.f32 %v300, %v336
        %v353 = vadd.f32 %v301, %v337
        %v354 = vadd.f32 %v302, %v338
        %v355 = vld [vmem:[%s250 + $0x2] sm:$0xff]
        %v356 = vld [vmem:[%s250 + $0xa] sm:$0xff]
        %v357 = vld [vmem:[%s250 + $0x1a] sm:$0xff]
        %v358 = vld [vmem:[%s250 + $0x22] sm:$0xff]
        %v359 = vld [vmem:[%s250 + $0x32] sm:$0xff]
        %v360 = vld [vmem:[%s250 + $0x3a] sm:$0xff]
        %v361 = vld [vmem:[%s250 + $0x4a] sm:$0xff]
        %v362 = vld [vmem:[%s250 + $0x52] sm:$0xff]
        %v363 = vld [vmem:[%s250 + $0x62] sm:$0xff]
        %v364 = vld [vmem:[%s250 + $0x6a] sm:$0xff]
        %v365 = vld [vmem:[%s250 + $0x7a] sm:$0xff]
        %v366 = vld [vmem:[%s250 + $0x82] sm:$0xff]
        %v367 = vld [vmem:[%s250 + $0x92] sm:$0xff]
        %v368 = vld [vmem:[%s250 + $0x9a] sm:$0xff]
        %v369 = vld [vmem:[%s250 + $0xaa] sm:$0xff]
        %v370 = vld [vmem:[%s250 + $0xb2] sm:$0xff]
        %v371 = vlaneseq
        %v372 = vshrl.u32 %v371, 7
        %v373 = vsub.s32 2, %v372
        %v374 = vrot.slane %v240, %v373
        %v375 = vmul.f32 %v355, %v374
        %v376 = vmul.f32 %v356, %v374
        %v377 = vmul.f32 %v357, %v374
        %v378 = vmul.f32 %v358, %v374
        %v379 = vmul.f32 %v359, %v374
        %v380 = vmul.f32 %v360, %v374
        %v381 = vmul.f32 %v361, %v374
        %v382 = vmul.f32 %v362, %v374
        %v383 = vmul.f32 %v363, %v374
        %v384 = vmul.f32 %v364, %v374
        %v385 = vmul.f32 %v365, %v374
        %v386 = vmul.f32 %v366, %v374
        %v387 = vmul.f32 %v367, %v374
        %v388 = vmul.f32 %v368, %v374
        %v389 = vmul.f32 %v369, %v374
        %v390 = vmul.f32 %v370, %v374
        %v391 = vadd.f32 %v339, %v375
        %v392 = vadd.f32 %v340, %v376
        %v393 = vadd.f32 %v341, %v377
        %v394 = vadd.f32 %v342, %v378
        %v395 = vadd.f32 %v343, %v379
        %v396 = vadd.f32 %v344, %v380
        %v397 = vadd.f32 %v345, %v381
        %v398 = vadd.f32 %v346, %v382
        %v399 = vadd.f32 %v347, %v383
        %v400 = vadd.f32 %v348, %v384
        %v401 = vadd.f32 %v349, %v385
        %v402 = vadd.f32 %v350, %v386
        %v403 = vadd.f32 %v351, %v387
        %v404 = vadd.f32 %v352, %v388
        %v405 = vadd.f32 %v353, %v389
        %v406 = vadd.f32 %v354, %v390
        %s407 = sadd.s32 %s239, 1
        %s408 = smul.u32 %s407, 24
        %s409 = scalar_lea.vmem %s236, %s408
        %v410 = vld [vmem:[%s409] sm:$0xff]
        %v411 = vld [vmem:[%s409 + $0x8] sm:$0xff]
        %v412 = vld [vmem:[%s409 + $0x18] sm:$0xff]
        %v413 = vld [vmem:[%s409 + $0x20] sm:$0xff]
        %v414 = vld [vmem:[%s409 + $0x30] sm:$0xff]
        %v415 = vld [vmem:[%s409 + $0x38] sm:$0xff]
        %v416 = vld [vmem:[%s409 + $0x48] sm:$0xff]
        %v417 = vld [vmem:[%s409 + $0x50] sm:$0xff]
        %v418 = vld [vmem:[%s409 + $0x60] sm:$0xff]
        %v419 = vld [vmem:[%s409 + $0x68] sm:$0xff]
        %v420 = vld [vmem:[%s409 + $0x78] sm:$0xff]
        %v421 = vld [vmem:[%s409 + $0x80] sm:$0xff]
        %v422 = vld [vmem:[%s409 + $0x90] sm:$0xff]
        %v423 = vld [vmem:[%s409 + $0x98] sm:$0xff]
        %v424 = vld [vmem:[%s409 + $0xa8] sm:$0xff]
        %v425 = vld [vmem:[%s409 + $0xb0] sm:$0xff]
        %v426 = vlaneseq
        %v427 = vshrl.u32 %v426, 7
        %v428 = vsub.s32 3, %v427
        %v429 = vrot.slane %v240, %v428
        %v430 = vmul.f32 %v410, %v429
        %v431 = vmul.f32 %v411, %v429
        %v432 = vmul.f32 %v412, %v429
        %v433 = vmul.f32 %v413, %v429
        %v434 = vmul.f32 %v414, %v429
        %v435 = vmul.f32 %v415, %v429
        %v436 = vmul.f32 %v416, %v429
        %v437 = vmul.f32 %v417, %v429
        %v438 = vmul.f32 %v418, %v429
        %v439 = vmul.f32 %v419, %v429
        %v440 = vmul.f32 %v420, %v429
        %v441 = vmul.f32 %v421, %v429
        %v442 = vmul.f32 %v422, %v429
        %v443 = vmul.f32 %v423, %v429
        %v444 = vmul.f32 %v424, %v429
        %v445 = vmul.f32 %v425, %v429
        %v446 = vadd.f32 %v391, %v430
        %v447 = vadd.f32 %v392, %v431
        %v448 = vadd.f32 %v393, %v432
        %v449 = vadd.f32 %v394, %v433
        %v450 = vadd.f32 %v395, %v434
        %v451 = vadd.f32 %v396, %v435
        %v452 = vadd.f32 %v397, %v436
        %v453 = vadd.f32 %v398, %v437
        %v454 = vadd.f32 %v399, %v438
        %v455 = vadd.f32 %v400, %v439
        %v456 = vadd.f32 %v401, %v440
        %v457 = vadd.f32 %v402, %v441
        %v458 = vadd.f32 %v403, %v442
        %v459 = vadd.f32 %v404, %v443
        %v460 = vadd.f32 %v405, %v444
        %v461 = vadd.f32 %v406, %v445
        %v462 = vld [vmem:[%s409 + $0x1] sm:$0xff]
        %v463 = vld [vmem:[%s409 + $0x9] sm:$0xff]
        %v464 = vld [vmem:[%s409 + $0x19] sm:$0xff]
        %v465 = vld [vmem:[%s409 + $0x21] sm:$0xff]
        %v466 = vld [vmem:[%s409 + $0x31] sm:$0xff]
        %v467 = vld [vmem:[%s409 + $0x39] sm:$0xff]
        %v468 = vld [vmem:[%s409 + $0x49] sm:$0xff]
        %v469 = vld [vmem:[%s409 + $0x51] sm:$0xff]
        %v470 = vld [vmem:[%s409 + $0x61] sm:$0xff]
        %v471 = vld [vmem:[%s409 + $0x69] sm:$0xff]
        %v472 = vld [vmem:[%s409 + $0x79] sm:$0xff]
        %v473 = vld [vmem:[%s409 + $0x81] sm:$0xff]
        %v474 = vld [vmem:[%s409 + $0x91] sm:$0xff]
        %v475 = vld [vmem:[%s409 + $0x99] sm:$0xff]
        %v476 = vld [vmem:[%s409 + $0xa9] sm:$0xff]
        %v477 = vld [vmem:[%s409 + $0xb1] sm:$0xff]
        %v478 = vlaneseq
        %v479 = vshrl.u32 %v478, 7
        %v480 = vsub.s32 4, %v479
        %v481 = vrot.slane %v240, %v480
        %v482 = vmul.f32 %v462, %v481
        %v483 = vmul.f32 %v463, %v481
        %v484 = vmul.f32 %v464, %v481
        %v485 = vmul.f32 %v465, %v481
        %v486 = vmul.f32 %v466, %v481
        %v487 = vmul.f32 %v467, %v481
        %v488 = vmul.f32 %v468, %v481
        %v489 = vmul.f32 %v469, %v481
        %v490 = vmul.f32 %v470, %v481
        %v491 = vmul.f32 %v471, %v481
        %v492 = vmul.f32 %v472, %v481
        %v493 = vmul.f32 %v473, %v481
        %v494 = vmul.f32 %v474, %v481
        %v495 = vmul.f32 %v475, %v481
        %v496 = vmul.f32 %v476, %v481
        %v497 = vmul.f32 %v477, %v481
        %v498 = vadd.f32 %v446, %v482
        %v499 = vadd.f32 %v447, %v483
        %v500 = vadd.f32 %v448, %v484
        %v501 = vadd.f32 %v449, %v485
        %v502 = vadd.f32 %v450, %v486
        %v503 = vadd.f32 %v451, %v487
        %v504 = vadd.f32 %v452, %v488
        %v505 = vadd.f32 %v453, %v489
        %v506 = vadd.f32 %v454, %v490
        %v507 = vadd.f32 %v455, %v491
        %v508 = vadd.f32 %v456, %v492
        %v509 = vadd.f32 %v457, %v493
        %v510 = vadd.f32 %v458, %v494
        %v511 = vadd.f32 %v459, %v495
        %v512 = vadd.f32 %v460, %v496
        %v513 = vadd.f32 %v461, %v497
        %v514 = vld [vmem:[%s409 + $0x2] sm:$0xff]
        %v515 = vld [vmem:[%s409 + $0xa] sm:$0xff]
        %v516 = vld [vmem:[%s409 + $0x1a] sm:$0xff]
        %v517 = vld [vmem:[%s409 + $0x22] sm:$0xff]
        %v518 = vld [vmem:[%s409 + $0x32] sm:$0xff]
        %v519 = vld [vmem:[%s409 + $0x3a] sm:$0xff]
        %v520 = vld [vmem:[%s409 + $0x4a] sm:$0xff]
        %v521 = vld [vmem:[%s409 + $0x52] sm:$0xff]
        %v522 = vld [vmem:[%s409 + $0x62] sm:$0xff]
        %v523 = vld [vmem:[%s409 + $0x6a] sm:$0xff]
        %v524 = vld [vmem:[%s409 + $0x7a] sm:$0xff]
        %v525 = vld [vmem:[%s409 + $0x82] sm:$0xff]
        %v526 = vld [vmem:[%s409 + $0x92] sm:$0xff]
        %v527 = vld [vmem:[%s409 + $0x9a] sm:$0xff]
        %v528 = vld [vmem:[%s409 + $0xaa] sm:$0xff]
        %v529 = vld [vmem:[%s409 + $0xb2] sm:$0xff]
        %v530 = vlaneseq
        %v531 = vshrl.u32 %v530, 7
        %v532 = vsub.s32 5, %v531
        %v533 = vrot.slane %v240, %v532
        %v534 = vmul.f32 %v514, %v533
        %v535 = vmul.f32 %v515, %v533
        %v536 = vmul.f32 %v516, %v533
        %v537 = vmul.f32 %v517, %v533
        %v538 = vmul.f32 %v518, %v533
        %v539 = vmul.f32 %v519, %v533
        %v540 = vmul.f32 %v520, %v533
        %v541 = vmul.f32 %v521, %v533
        %v542 = vmul.f32 %v522, %v533
        %v543 = vmul.f32 %v523, %v533
        %v544 = vmul.f32 %v524, %v533
        %v545 = vmul.f32 %v525, %v533
        %v546 = vmul.f32 %v526, %v533
        %v547 = vmul.f32 %v527, %v533
        %v548 = vmul.f32 %v528, %v533
        %v549 = vmul.f32 %v529, %v533
        %v550 = vadd.f32 %v498, %v534
        %v551 = vadd.f32 %v499, %v535
        %v552 = vadd.f32 %v500, %v536
        %v553 = vadd.f32 %v501, %v537
        %v554 = vadd.f32 %v502, %v538
        %v555 = vadd.f32 %v503, %v539
        %v556 = vadd.f32 %v504, %v540
        %v557 = vadd.f32 %v505, %v541
        %v558 = vadd.f32 %v506, %v542
        %v559 = vadd.f32 %v507, %v543
        %v560 = vadd.f32 %v508, %v544
        %v561 = vadd.f32 %v509, %v545
        %v562 = vadd.f32 %v510, %v546
        %v563 = vadd.f32 %v511, %v547
        %v564 = vadd.f32 %v512, %v548
        %v565 = vadd.f32 %v513, %v549
        %s566 = sadd.s32 %s239, 2
        %s567 = smul.u32 %s566, 24
        %s568 = scalar_lea.vmem %s236, %s567
        %v569 = vld [vmem:[%s568] sm:$0xff]
        %v570 = vld [vmem:[%s568 + $0x8] sm:$0xff]
        %v571 = vld [vmem:[%s568 + $0x18] sm:$0xff]
        %v572 = vld [vmem:[%s568 + $0x20] sm:$0xff]
        %v573 = vld [vmem:[%s568 + $0x30] sm:$0xff]
        %v574 = vld [vmem:[%s568 + $0x38] sm:$0xff]
        %v575 = vld [vmem:[%s568 + $0x48] sm:$0xff]
        %v576 = vld [vmem:[%s568 + $0x50] sm:$0xff]
        %v577 = vld [vmem:[%s568 + $0x60] sm:$0xff]
        %v578 = vld [vmem:[%s568 + $0x68] sm:$0xff]
        %v579 = vld [vmem:[%s568 + $0x78] sm:$0xff]
        %v580 = vld [vmem:[%s568 + $0x80] sm:$0xff]
        %v581 = vld [vmem:[%s568 + $0x90] sm:$0xff]
        %v582 = vld [vmem:[%s568 + $0x98] sm:$0xff]
        %v583 = vld [vmem:[%s568 + $0xa8] sm:$0xff]
        %v584 = vld [vmem:[%s568 + $0xb0] sm:$0xff]
        %v585 = vlaneseq
        %v586 = vshrl.u32 %v585, 7
        %v587 = vsub.s32 6, %v586
        %v588 = vrot.slane %v240, %v587
        %v589 = vmul.f32 %v569, %v588
        %v590 = vmul.f32 %v570, %v588
        %v591 = vmul.f32 %v571, %v588
        %v592 = vmul.f32 %v572, %v588
        %v593 = vmul.f32 %v573, %v588
        %v594 = vmul.f32 %v574, %v588
        %v595 = vmul.f32 %v575, %v588
        %v596 = vmul.f32 %v576, %v588
        %v597 = vmul.f32 %v577, %v588
        %v598 = vmul.f32 %v578, %v588
        %v599 = vmul.f32 %v579, %v588
        %v600 = vmul.f32 %v580, %v588
        %v601 = vmul.f32 %v581, %v588
        %v602 = vmul.f32 %v582, %v588
        %v603 = vmul.f32 %v583, %v588
        %v604 = vmul.f32 %v584, %v588
        %v605 = vadd.f32 %v550, %v589
        %v606 = vadd.f32 %v551, %v590
        %v607 = vadd.f32 %v552, %v591
        %v608 = vadd.f32 %v553, %v592
        %v609 = vadd.f32 %v554, %v593
        %v610 = vadd.f32 %v555, %v594
        %v611 = vadd.f32 %v556, %v595
        %v612 = vadd.f32 %v557, %v596
        %v613 = vadd.f32 %v558, %v597
        %v614 = vadd.f32 %v559, %v598
        %v615 = vadd.f32 %v560, %v599
        %v616 = vadd.f32 %v561, %v600
        %v617 = vadd.f32 %v562, %v601
        %v618 = vadd.f32 %v563, %v602
        %v619 = vadd.f32 %v564, %v603
        %v620 = vadd.f32 %v565, %v604
        %v621 = vld [vmem:[%s568 + $0x1] sm:$0xff]
        %v622 = vld [vmem:[%s568 + $0x9] sm:$0xff]
        %v623 = vld [vmem:[%s568 + $0x19] sm:$0xff]
        %v624 = vld [vmem:[%s568 + $0x21] sm:$0xff]
        %v625 = vld [vmem:[%s568 + $0x31] sm:$0xff]
        %v626 = vld [vmem:[%s568 + $0x39] sm:$0xff]
        %v627 = vld [vmem:[%s568 + $0x49] sm:$0xff]
        %v628 = vld [vmem:[%s568 + $0x51] sm:$0xff]
        %v629 = vld [vmem:[%s568 + $0x61] sm:$0xff]
        %v630 = vld [vmem:[%s568 + $0x69] sm:$0xff]
        %v631 = vld [vmem:[%s568 + $0x79] sm:$0xff]
        %v632 = vld [vmem:[%s568 + $0x81] sm:$0xff]
        %v633 = vld [vmem:[%s568 + $0x91] sm:$0xff]
        %v634 = vld [vmem:[%s568 + $0x99] sm:$0xff]
        %v635 = vld [vmem:[%s568 + $0xa9] sm:$0xff]
        %v636 = vld [vmem:[%s568 + $0xb1] sm:$0xff]
        %v637 = vlaneseq
        %v638 = vshrl.u32 %v637, 7
        %v639 = vsub.s32 7, %v638
        %v640 = vrot.slane %v240, %v639
        %v641 = vmul.f32 %v621, %v640
        %v642 = vmul.f32 %v622, %v640
        %v643 = vmul.f32 %v623, %v640
        %v644 = vmul.f32 %v624, %v640
        %v645 = vmul.f32 %v625, %v640
        %v646 = vmul.f32 %v626, %v640
        %v647 = vmul.f32 %v627, %v640
        %v648 = vmul.f32 %v628, %v640
        %v649 = vmul.f32 %v629, %v640
        %v650 = vmul.f32 %v630, %v640
        %v651 = vmul.f32 %v631, %v640
        %v652 = vmul.f32 %v632, %v640
        %v653 = vmul.f32 %v633, %v640
        %v654 = vmul.f32 %v634, %v640
        %v655 = vmul.f32 %v635, %v640
        %v656 = vmul.f32 %v636, %v640
        %v657 = vadd.f32 %v605, %v641
        %v658 = vadd.f32 %v606, %v642
        %v659 = vadd.f32 %v607, %v643
        %v660 = vadd.f32 %v608, %v644
        %v661 = vadd.f32 %v609, %v645
        %v662 = vadd.f32 %v610, %v646
        %v663 = vadd.f32 %v611, %v647
        %v664 = vadd.f32 %v612, %v648
        %v665 = vadd.f32 %v613, %v649
        %v666 = vadd.f32 %v614, %v650
        %v667 = vadd.f32 %v615, %v651
        %v668 = vadd.f32 %v616, %v652
        %v669 = vadd.f32 %v617, %v653
        %v670 = vadd.f32 %v618, %v654
        %v671 = vadd.f32 %v619, %v655
        %v672 = vadd.f32 %v620, %v656
        %v673 = vld [vmem:[%s568 + $0x2] sm:$0xff]
        %v674 = vld [vmem:[%s568 + $0xa] sm:$0xff]
        %v675 = vld [vmem:[%s568 + $0x1a] sm:$0xff]
        %v676 = vld [vmem:[%s568 + $0x22] sm:$0xff]
        %v677 = vld [vmem:[%s568 + $0x32] sm:$0xff]
        %v678 = vld [vmem:[%s568 + $0x3a] sm:$0xff]
        %v679 = vld [vmem:[%s568 + $0x4a] sm:$0xff]
        %v680 = vld [vmem:[%s568 + $0x52] sm:$0xff]
        %v681 = vld [vmem:[%s568 + $0x62] sm:$0xff]
        %v682 = vld [vmem:[%s568 + $0x6a] sm:$0xff]
        %v683 = vld [vmem:[%s568 + $0x7a] sm:$0xff]
        %v684 = vld [vmem:[%s568 + $0x82] sm:$0xff]
        %v685 = vld [vmem:[%s568 + $0x92] sm:$0xff]
        %v686 = vld [vmem:[%s568 + $0x9a] sm:$0xff]
        %v687 = vld [vmem:[%s568 + $0xaa] sm:$0xff]
        %v688 = vld [vmem:[%s568 + $0xb2] sm:$0xff]
        %v689 = vlaneseq
        %v690 = vshrl.u32 %v689, 7
        %v691 = vsub.s32 0, %v690
        %v692 = vrot.slane %v241, %v691
        %v693 = vmul.f32 %v673, %v692
        %v694 = vmul.f32 %v674, %v692
        %v695 = vmul.f32 %v675, %v692
        %v696 = vmul.f32 %v676, %v692
        %v697 = vmul.f32 %v677, %v692
        %v698 = vmul.f32 %v678, %v692
        %v699 = vmul.f32 %v679, %v692
        %v700 = vmul.f32 %v680, %v692
        %v701 = vmul.f32 %v681, %v692
        %v702 = vmul.f32 %v682, %v692
        %v703 = vmul.f32 %v683, %v692
        %v704 = vmul.f32 %v684, %v692
        %v705 = vmul.f32 %v685, %v692
        %v706 = vmul.f32 %v686, %v692
        %v707 = vmul.f32 %v687, %v692
        %v708 = vmul.f32 %v688, %v692
        %v709 = vadd.f32 %v657, %v693
        %v710 = vadd.f32 %v658, %v694
        %v711 = vadd.f32 %v659, %v695
        %v712 = vadd.f32 %v660, %v696
        %v713 = vadd.f32 %v661, %v697
        %v714 = vadd.f32 %v662, %v698
        %v715 = vadd.f32 %v663, %v699
        %v716 = vadd.f32 %v664, %v700
        %v717 = vadd.f32 %v665, %v701
        %v718 = vadd.f32 %v666, %v702
        %v719 = vadd.f32 %v667, %v703
        %v720 = vadd.f32 %v668, %v704
        %v721 = vadd.f32 %v669, %v705
        %v722 = vadd.f32 %v670, %v706
        %v723 = vadd.f32 %v671, %v707
        %v724 = vadd.f32 %v672, %v708
        %v725 = vmax.f32 %v709, 0.0
        %v726 = vmax.f32 %v710, 0.0
        %v727 = vmax.f32 %v711, 0.0
        %v728 = vmax.f32 %v712, 0.0
        %v729 = vmax.f32 %v713, 0.0
        %v730 = vmax.f32 %v714, 0.0
        %v731 = vmax.f32 %v715, 0.0
        %v732 = vmax.f32 %v716, 0.0
        %v733 = vmax.f32 %v717, 0.0
        %v734 = vmax.f32 %v718, 0.0
        %v735 = vmax.f32 %v719, 0.0
        %v736 = vmax.f32 %v720, 0.0
        %v737 = vmax.f32 %v721, 0.0
        %v738 = vmax.f32 %v722, 0.0
        %v739 = vmax.f32 %v723, 0.0
        %v740 = vmax.f32 %v724, 0.0
        %v741 = vpack.c.bf16 %v726, %v725
        %v742 = vpack.c.bf16 %v728, %v727
        %v743 = vpack.c.bf16 %v730, %v729
        %v744 = vpack.c.bf16 %v732, %v731
        %v745 = vpack.c.bf16 %v734, %v733
        %v746 = vpack.c.bf16 %v736, %v735
        %v747 = vpack.c.bf16 %v738, %v737
        %v748 = vpack.c.bf16 %v740, %v739
        %v749 = vld [vmem:[%s3] sm:$0xf]
        %v750 = vld [vmem:[%s3 + $0x4] sm:$0xf]
        %v751 = vld [vmem:[%s3 + $0x8] sm:$0xf]
        %v752 = vld [vmem:[%s3 + $0xc] sm:$0xf]
        %v753 = vld [vmem:[%s3 + $0x10] sm:$0xf]
        %v754 = vld [vmem:[%s3 + $0x14] sm:$0xf]
        %v755 = vld [vmem:[%s3 + $0x18] sm:$0xf]
        %v756 = vld [vmem:[%s3 + $0x1c] sm:$0xf]
        %v757 = vld [vmem:[%s3 + $0x20] sm:$0xf]
        %v758 = vld [vmem:[%s3 + $0x24] sm:$0xf]
        %v759 = vld [vmem:[%s3 + $0x28] sm:$0xf]
        %v760 = vld [vmem:[%s3 + $0x2c] sm:$0xf]
        %v761 = vld [vmem:[%s3 + $0x30] sm:$0xf]
        %v762 = vld [vmem:[%s3 + $0x34] sm:$0xf]
        %v763 = vld [vmem:[%s3 + $0x38] sm:$0xf]
        %v764 = vld [vmem:[%s3 + $0x3c] sm:$0xf]
        %v765 = vld [vmem:[%s4] sm:$0x1]
        %v767 = vlaneseq
        %v768 = vshrl.u32 %v767, 7
        %v769 = vsub.s32 0, %v768
        %v770 = vrot.slane %v765, %v769
        %v788 = vunpack.c.l.b16 %v749
        %v789 = vunpack.c.l.b16 %v750
        %v790 = vunpack.c.l.b16 %v751
        %v791 = vunpack.c.l.b16 %v752
        %v792 = vunpack.c.l.b16 %v753
        %v793 = vunpack.c.l.b16 %v754
        %v794 = vunpack.c.l.b16 %v755
        %v795 = vunpack.c.l.b16 %v756
        %v796 = vunpack.c.l.b16 %v757
        %v797 = vunpack.c.l.b16 %v758
        %v798 = vunpack.c.l.b16 %v759
        %v799 = vunpack.c.l.b16 %v760
        %v800 = vunpack.c.l.b16 %v761
        %v801 = vunpack.c.l.b16 %v762
        %v802 = vunpack.c.l.b16 %v763
        %v803 = vunpack.c.l.b16 %v764
        %v804 = vpack.c.b16 %v789, %v788
        %v805 = vpack.c.b16 %v791, %v790
        %v806 = vpack.c.b16 %v793, %v792
        %v807 = vpack.c.b16 %v795, %v794
        %v808 = vpack.c.b16 %v797, %v796
        %v809 = vpack.c.b16 %v799, %v798
        %v810 = vpack.c.b16 %v801, %v800
        %v811 = vpack.c.b16 %v803, %v802
        %820 = vmatprep.subr.bf16.mxu0 0
        %821 = vmatpush1.bf16.msra.mxu0 %v804
        %822 = vmatprep.subr.bf16.mxu0 0
        %823 = vmatpush1.bf16.msra.mxu0 %v805
        %824 = vmatprep.subr.bf16.mxu0 0
        %825 = vmatpush1.bf16.msra.mxu0 %v806
        %826 = vmatprep.subr.bf16.mxu0 0
        %827 = vmatpush1.bf16.msra.mxu0 %v807
        %828 = vmatprep.subr.bf16.mxu0 0
        %829 = vmatpush1.bf16.msra.mxu0 %v808
        %830 = vmatprep.subr.bf16.mxu0 0
        %831 = vmatpush1.bf16.msra.mxu0 %v809
        %832 = vmatprep.subr.bf16.mxu0 0
        %833 = vmatpush1.bf16.msra.mxu0 %v810
        %834 = vmatprep.subr.bf16.mxu0 0
        %835 = vmatpush1.bf16.msra.mxu0 %v811
        %836 = vmatprep.subr.bf16.mxu0 0
        %837 = vmatpush1.bf16.msra.mxu0 0
        %838 = vmatprep.subr.bf16.mxu0 0
        %839 = vmatpush1.bf16.msra.mxu0 0
        %840 = vmatprep.subr.bf16.mxu0 0
        %841 = vmatpush1.bf16.msra.mxu0 0
        %842 = vmatprep.subr.bf16.mxu0 0
        %843 = vmatpush1.bf16.msra.mxu0 0
        %844 = vmatprep.subr.bf16.mxu0 0
        %845 = vmatpush1.bf16.msra.mxu0 0
        %846 = vmatprep.subr.bf16.mxu0 0
        %847 = vmatpush1.bf16.msra.mxu0 0
        %848 = vmatprep.subr.bf16.mxu0 0
        %849 = vmatpush1.bf16.msra.mxu0 0
        %850 = vmatprep.subr.bf16.mxu0 0
        %851 = vmatpush1.bf16.msra.mxu0 0
        %852 = vmatprep.mubr.bf16.mxu0 0
        %853 = vmatmul.mubr.bf16.gmra.mrb[0].mxu0 %v741
        %v854 = vpop.f32.mrb[0].mxu0
        %v855 = vadd.f32 %v770, %v854
        %v856 = vpop.f32.mrb[0].mxu0
        %v857 = vpop.f32.mrb[0].mxu0
        %v858 = vadd.f32 %v770, %v857
        %v859 = vpop.f32.mrb[0].mxu0
        %860 = vmatprep.mubr.bf16.mxu0 0
        %861 = vmatmul.mubr.bf16.gmra.mrb[0].mxu0 %v742
        %v862 = vpop.f32.mrb[0].mxu0
        %v863 = vadd.f32 %v770, %v862
        %v864 = vpop.f32.mrb[0].mxu0
        %v865 = vpop.f32.mrb[0].mxu0
        %v866 = vadd.f32 %v770, %v865
        %v867 = vpop.f32.mrb[0].mxu0
        %868 = vmatprep.mubr.bf16.mxu0 0
        %869 = vmatmul.mubr.bf16.gmra.mrb[0].mxu0 %v743
        %v870 = vpop.f32.mrb[0].mxu0
        %v871 = vadd.f32 %v770, %v870
        %v872 = vpop.f32.mrb[0].mxu0
        %v873 = vpop.f32.mrb[0].mxu0
        %v874 = vadd.f32 %v770, %v873
        %v875 = vpop.f32.mrb[0].mxu0
        %876 = vmatprep.mubr.bf16.mxu0 0
        %877 = vmatmul.mubr.bf16.gmra.mrb[0].mxu0 %v744
        %v878 = vpop.f32.mrb[0].mxu0
        %v879 = vadd.f32 %v770, %v878
        %v880 = vpop.f32.mrb[0].mxu0
        %v881 = vpop.f32.mrb[0].mxu0
        %v882 = vadd.f32 %v770, %v881
        %v883 = vpop.f32.mrb[0].mxu0
        %884 = vmatprep.mubr.bf16.mxu0 0
        %885 = vmatmul.mubr.bf16.gmra.mrb[0].mxu0 %v745
        %v886 = vpop.f32.mrb[0].mxu0
        %v887 = vadd.f32 %v770, %v886
        %v888 = vpop.f32.mrb[0].mxu0
        %v889 = vpop.f32.mrb[0].mxu0
        %v890 = vadd.f32 %v770, %v889
        %v891 = vpop.f32.mrb[0].mxu0
        %892 = vmatprep.mubr.bf16.mxu0 0
        %893 = vmatmul.mubr.bf16.gmra.mrb[0].mxu0 %v746
        %v894 = vpop.f32.mrb[0].mxu0
        %v895 = vadd.f32 %v770, %v894
        %v896 = vpop.f32.mrb[0].mxu0
        %v897 = vpop.f32.mrb[0].mxu0
        %v898 = vadd.f32 %v770, %v897
        %v899 = vpop.f32.mrb[0].mxu0
        %900 = vmatprep.mubr.bf16.mxu0 0
        %901 = vmatmul.mubr.bf16.gmra.mrb[0].mxu0 %v747
        %v902 = vpop.f32.mrb[0].mxu0
        %v903 = vadd.f32 %v770, %v902
        %v904 = vpop.f32.mrb[0].mxu0
        %v905 = vpop.f32.mrb[0].mxu0
        %v906 = vadd.f32 %v770, %v905
        %v907 = vpop.f32.mrb[0].mxu0
        %908 = vmatprep.mubr.bf16.mxu0 0
        %909 = vmatmul.mubr.bf16.gmra.mrb[0].mxu0 %v748
        %v910 = vpop.f32.mrb[0].mxu0
        %v911 = vadd.f32 %v770, %v910
        %v912 = vpop.f32.mrb[0].mxu0
        %v913 = vpop.f32.mrb[0].mxu0
        %v914 = vadd.f32 %v770, %v913
        %v915 = vpop.f32.mrb[0].mxu0
        %916 = vdwg.mxu0
        %917 = vst [vmem:[%s231] sm:$0xff] %v855
        %918 = vst [vmem:[%s231 + $0x8] sm:$0xff] %v858
        %919 = vst [vmem:[%s231 + $0x10] sm:$0xff] %v863
        %920 = vst [vmem:[%s231 + $0x18] sm:$0xff] %v866
        %921 = vst [vmem:[%s231 + $0x20] sm:$0xff] %v871
        %922 = vst [vmem:[%s231 + $0x28] sm:$0xff] %v874
        %923 = vst [vmem:[%s231 + $0x30] sm:$0xff] %v879
        %924 = vst [vmem:[%s231 + $0x38] sm:$0xff] %v882
        %925 = vst [vmem:[%s231 + $0x40] sm:$0xff] %v887
        %926 = vst [vmem:[%s231 + $0x48] sm:$0xff] %v890
        %927 = vst [vmem:[%s231 + $0x50] sm:$0xff] %v895
        %928 = vst [vmem:[%s231 + $0x58] sm:$0xff] %v898
        %929 = vst [vmem:[%s231 + $0x60] sm:$0xff] %v903
        %930 = vst [vmem:[%s231 + $0x68] sm:$0xff] %v906
        %931 = vst [vmem:[%s231 + $0x70] sm:$0xff] %v911
        %932 = vst [vmem:[%s231 + $0x78] sm:$0xff] %v914
        %s933 = sand.u32 %s151, 1
        %s934 = scalar_lea.sflag [#allocation3], %s933
        %s935 = sand.u32 %s151, 1
        %s936 = smul.addr %s935, 128
        %s937 = scalar_lea.vmem [#allocation2], %s936
        // Predicated region
        $region41: #{tpu_custom_call.1} parent=39 // pred_check
          %p938 = pneg %p161
        $region42: #{tpu_custom_call.1} parent=39 // pred_check_branch
          %940 = sbr.rel (%p938) target = $region44
        $region43: #{tpu_custom_call.1} parent=39 // pred_region
          %s941 = smul.u32 8, %s24
          %s943 = ssub.s32 2048, 2048
          %944 = vsyncadd %s934, %s943
          %s945 = smul.addr %s941, 2
          %s946 = smul.addr %s23, 32
          %s947 = sadd.s32 %s945, %s946
          %s948 = smul.addr %s947, 128
          %s949 = scalar_lea.hbm %s5, %s948
          %s950 = sshll.u32 %s937, 4
          %s951 = int_to_ptr.vmem [resolvable:$true] %s950
          %956 = dma.vmem_to_hbm [thread:$0]  %s951, 2048, %s949, %s934, 128, 128, 8
        $region44: #{tpu_custom_call.1} parent=39 // pred_fallthru
          _
      $region40: #{tpu_custom_call.1} parent=5 // pred_fallthru
        _
      %p957 = scmp.le.s32.totalorder 2, %s14
      // Predicated region
      $region45: #{tpu_custom_call.1} parent=5 // pred_check
        %p958 = pneg %p957
      $region46: #{tpu_custom_call.1} parent=5 // pred_check_branch
        %960 = sbr.rel (%p958) target = $region48
      $region47: #{tpu_custom_call.1} parent=5 // pred_region
        %s961 = ssub.s32 %s14, 2
        // Predicated region
        $region49: #{tpu_custom_call.1} parent=47 // pred_check
          %p962 = pneg %p167
        $region50: #{tpu_custom_call.1} parent=47 // pred_check_branch
          %964 = sbr.rel (%p962) target = $region52
        $region51: #{tpu_custom_call.1} parent=47 // pred_region
          %s965 = sand.u32 %s152, 1
          %s966 = scalar_lea.sflag [#allocation3], %s965
          %s967 = sand.u32 %s152, 1
          %s968 = smul.addr %s967, 128
          %s969 = scalar_lea.vmem [#allocation2], %s968
          %970 = dma.done %s966, 2048
        $region52: #{tpu_custom_call.1} parent=47 // pred_fallthru
          _
      $region48: #{tpu_custom_call.1} parent=5 // pred_fallthru
        _
    $region6: #{tpu_custom_call.1} parent=1 // loop_footer
      %s18 = sadd.s32 1, %s14
    $region7: #{tpu_custom_call.1} parent=1 // loop_footer_branch
      %13 = sbr.rel target = $region3
    $region8: #{tpu_custom_call.1} parent=1 // loop_exit
      _
    %971 = vsyncpa [#allocation3], 1
    %s972 = scalar_lea.sflag [#allocation3], 1
    %973 = vsyncpa %s972, 1

</llo_original>
